<compile_context>
chip_gen: v7x
topology: tpu7x:2x2x1
jax: 0.10.0
libtpu: 0.0.40
codegen_flags: <defaults>
</compile_context>

<pallas_src>
import functools

import jax
import jax.numpy as jnp
from jax.experimental import pallas as pl
from jax.experimental.pallas import tpu as pltpu


# ---------------------------------------------------------------------------
# Fused kernel: depthwise 3x3 + pointwise 1x1 + BN as ONE MXU matmul
# ---------------------------------------------------------------------------
def _convbn_kernel(x_ref, w2_ref, b_ref, o_ref, *, H, W, matmul_dtype):
    # x_ref : (bt, Cin, H*W)   NCHW input, spatial flattened onto the lane axis
    # w2_ref: (Cout, 9*Cin)    depthwise taps folded into pointwise/BN weights
    # b_ref : (Cout, 1)        pointwise bias with BN scale/shift folded in
    # o_ref : (bt, Cout, H*W)
    bt, Cin, HW = x_ref.shape
    N = bt * HW

    def _mod(a, m):  # m is a static python int; shift/and when power of two
        return (a & (m - 1)) if (m & (m - 1)) == 0 else (a % m)

    # ---- merge the batch tile into the lane (matmul-N) axis -----------------
    if bt == 1:
        x = x_ref[0].astype(jnp.float32)                         # (Cin, HW)
    else:
        x = jnp.concatenate([x_ref[b] for b in range(bt)],
                            axis=1).astype(jnp.float32)          # (Cin, N)

    # ---- hoisted, lane-only boundary masks (shape (1, N)) -------------------
    n_idx = jax.lax.broadcasted_iota(jnp.int32, (1, N), 1)
    r = _mod(n_idx, HW) if bt > 1 else n_idx     # flattened pos within image
    j = _mod(r, W)                               # column index
    top = r >= W                                 # row i >= 1   (dh == 0 taps)
    bot = r < (H - 1) * W                        # row i <  H-1 (dh == 2 taps)
    lft = j >= 1                                 # col j >= 1   (dw == 0 taps)
    rgt = j < W - 1                              # col j <  W-1 (dw == 2 taps)
    row_m = (top, None, bot)
    col_m = (lft, None, rgt)
    masks = []
    for dh in range(3):
        for dw in range(3):
            rm, cm = row_m[dh], col_m[dw]
            if rm is None:
                masks.append(cm)
            elif cm is None:
                masks.append(rm)
            else:
                masks.append(jnp.logical_and(rm, cm))

    # ---- stack the 9 taps: static lane rolls (XLU) + hoisted masks ----------
    # Wrap-around lanes produced by a roll (across rows, images, or the global
    # boundary) are exactly the masked positions, so the result is exact.
    parts = []
    for dh in range(3):
        for dw in range(3):
            off = (dh - 1) * W + (dw - 1)        # flattened source offset
            tap = x if off == 0 else pltpu.roll(x, shift=(-off) % N, axis=1)
            m = masks[dh * 3 + dw]
            if m is not None:
                tap = jnp.where(m, tap, 0.0)
            parts.append(tap)
    stag = jnp.concatenate(parts, axis=0)        # (9*Cin, N)

    # ---- single MXU matmul (K = 9*Cin) covers depthwise + pointwise + BN ----
    y = jnp.dot(w2_ref[...].astype(matmul_dtype),
                stag.astype(matmul_dtype),
                preferred_element_type=jnp.float32)              # (Cout, N)
    y = (y + b_ref[...].astype(jnp.float32)).astype(o_ref.dtype)

    # ---- lane-dense stores (HW is a multiple of 128 at the demo size) -------
    if bt == 1:
        o_ref[0] = y
    else:
        for b in range(bt):
            o_ref[b] = y[:, b * HW:(b + 1) * HW]


# ---------------------------------------------------------------------------
# Wrapper
# ---------------------------------------------------------------------------
@functools.partial(jax.jit, static_argnames=("batch_tile", "matmul_dtype"))
def convbn_forward(x, folded_params, *, batch_tile=None,
                   matmul_dtype=jnp.bfloat16):
    """ConvBN forward.  x: (B, Cin, H, W) NCHW.  Returns (B, Cout, H, W).

    Output dtype == input dtype: pass bf16 activations on v5e/v6e to halve
    HBM traffic.  `batch_tile` images are processed per grid step (default:
    all of them -> grid of 1, no per-step overhead at small sizes).
    """
    w2, bfold = folded_params
    B, Cin, H, W = x.shape
    Cout = w2.shape[0]
    HW = H * W

    bt = B if batch_tile is None else batch_tile
    assert B % bt == 0, (B, bt)
    nb = B // bt

    x_flat = x.reshape(B, Cin, HW)              # free: merges contiguous dims

    out = pl.pallas_call(
        functools.partial(_convbn_kernel, H=H, W=W, matmul_dtype=matmul_dtype),
        out_shape=jax.ShapeDtypeStruct((B, Cout, HW), x.dtype),
        grid_spec=pltpu.PrefetchScalarGridSpec(
            num_scalar_prefetch=0,
            grid=(nb,),
            in_specs=[
                pl.BlockSpec((bt, Cin, HW), lambda g: (g, 0, 0)),
                pl.BlockSpec((Cout, 9 * Cin), lambda g: (0, 0)),
                pl.BlockSpec((Cout, 1), lambda g: (0, 0)),
            ],
            out_specs=pl.BlockSpec((bt, Cout, HW), lambda g: (g, 0, 0)),
        ),
        compiler_params=pltpu.CompilerParams(
            dimension_semantics=("parallel",)),
    )(x_flat, w2, bfold)

    return out.reshape(B, Cout, H, W)


# ---------------------------------------------------------------------------
# Parameter construction (matches ConvBN.init_weight) + host-side folding
# ---------------------------------------------------------------------------
def make_convbn_params(key, in_chan, out_chan, bn_eps=0.001):
    k_dw, k_pw = jax.random.split(key)
    # kaiming_normal_(a=1): gain = 1. depthwise fan_in = 9, pointwise fan_in = Cin
    dw = jax.random.normal(k_dw, (in_chan, 3, 3), jnp.float32) * (1.0 / 3.0)
    pw = jax.random.normal(k_pw, (out_chan, in_chan), jnp.float32) * in_chan ** -0.5
    pwb = jnp.zeros((out_chan,), jnp.float32)                      # bias = 0
    # BatchNorm2d defaults: gamma=1, beta=0, running_mean=0, running_var=1
    return dict(dw=dw, pw=pw, pwb=pwb,
                gamma=jnp.ones((out_chan,), jnp.float32),
                beta=jnp.zeros((out_chan,), jnp.float32),
                rmean=jnp.zeros((out_chan,), jnp.float32),
                rvar=jnp.ones((out_chan,), jnp.float32),
                eps=bn_eps)


def fold_convbn_params(p):
    """Fold BN (inference stats), pointwise bias AND the 9 depthwise taps.

    Returns:
      w2   : (Cout, 9*Cin)  with W2[co, t*Cin + ci] = (pw*s)[co, ci] * dw[ci, t]
      bfold: (Cout, 1)
    """
    s = p["gamma"] / jnp.sqrt(p["rvar"] + p["eps"])                 # (Cout,)
    t = p["beta"] - p["rmean"] * s                                  # (Cout,)
    wfold = p["pw"] * s[:, None]                                    # (Cout, Cin)
    bfold = (p["pwb"] * s + t)[:, None]                             # (Cout, 1)
    cin = p["dw"].shape[0]
    dww = p["dw"].reshape(cin, 9)                                   # (Cin, 9), t = dh*3+dw
    w2 = (wfold[:, None, :] * dww.T[None, :, :]).reshape(wfold.shape[0], 9 * cin)
    return w2, bfold


def convbn_reference(x, p):
    """Plain-JAX reference (inference-mode BN) for a numerical sanity check."""
    Cin = x.shape[1]
    dwk = p["dw"].reshape(Cin, 1, 3, 3)
    y = jax.lax.conv_general_dilated(
        x, dwk, window_strides=(1, 1), padding=((1, 1), (1, 1)),
        feature_group_count=Cin,
        dimension_numbers=("NCHW", "OIHW", "NCHW"),
        precision=jax.lax.Precision.HIGHEST)
    y = jnp.einsum("bchw,oc->bohw", y, p["pw"],
                   precision=jax.lax.Precision.HIGHEST)
    y = y + p["pwb"][None, :, None, None]
    s = p["gamma"] / jnp.sqrt(p["rvar"] + p["eps"])
    t = p["beta"] - p["rmean"] * s
    return y * s[None, :, None, None] + t[None, :, None, None]


if __name__ == "__main__":
    key = jax.random.PRNGKey(0)
    k_par, k_x = jax.random.split(key)

    B, Cin, Cout, H, W = 2, 32, 32, 16, 16

    params = make_convbn_params(k_par, Cin, Cout)
    folded = fold_convbn_params(params)
    x = jax.random.normal(k_x, (B, Cin, H, W), jnp.float32)

    out = convbn_forward(x, folded)
    out = jax.block_until_ready(out)

    assert out.shape == (B, Cout, H, W), out.shape
    assert bool(jnp.all(jnp.isfinite(out)))

    # Sanity check against the plain-JAX reference (bf16 MXU operands bound
    # the error to a few 1e-3 at these O(1) magnitudes; use
    # matmul_dtype=jnp.float32 for tight validation).
    ref = convbn_reference(x, params)
    err = float(jnp.max(jnp.abs(out - ref)))
    assert err < 0.1, f"max abs err vs reference: {err}"

    print("KERNEL_OK")
</pallas_src>

<mosaic_0001>
module attributes {stable_mosaic.version = 11 : i64} {
  func.func @_convbn_kernel(%arg0: i32, %arg1: memref<2x32x256xf32, #tpu.memory_space<vmem>>, %arg2: memref<32x288xf32, #tpu.memory_space<vmem>>, %arg3: memref<32x1xf32, #tpu.memory_space<vmem>>, %arg4: memref<2x32x256xf32, #tpu.memory_space<vmem>>) attributes {dimension_semantics = [#tpu.dimension_semantics<parallel>], iteration_bounds = array<i64: 1>, scalar_prefetch = 0 : i64, scratch_operands = 0 : i64, tpu.core_type = #tpu.core_type<tc>, window_params = [{transform_indices = @transform_0, window_bounds = array<i64: 2, 32, 256>}, {pipeline_mode = #tpu.pipeline_mode<synchronous>, transform_indices = @transform_1, window_bounds = array<i64: 32, 288>}, {pipeline_mode = #tpu.pipeline_mode<synchronous>, transform_indices = @transform_2, window_bounds = array<i64: 32, 1>}, {transform_indices = @transform_3, window_bounds = array<i64: 2, 32, 256>}]} {
    %c0 = arith.constant 0 : index
    %c0_0 = arith.constant 0 : index
    %c0_1 = arith.constant 0 : index
    %0 = vector.load %arg1[%c0, %c0_0, %c0_1] : memref<2x32x256xf32, #tpu.memory_space<vmem>>, vector<1x32x256xf32>
    %1 = vector.shape_cast %0 : vector<1x32x256xf32> to vector<32x256xf32>
    %c1 = arith.constant 1 : index
    %c0_2 = arith.constant 0 : index
    %c0_3 = arith.constant 0 : index
    %2 = vector.load %arg1[%c1, %c0_2, %c0_3] : memref<2x32x256xf32, #tpu.memory_space<vmem>>, vector<1x32x256xf32>
    %3 = vector.shape_cast %2 : vector<1x32x256xf32> to vector<32x256xf32>
    %4 = tpu.concatenate %1, %3 in 1 : vector<32x256xf32>, vector<32x256xf32> -> vector<32x512xf32>
    %5 = tpu.iota {dimensions = array<i32: 1>} : vector<1x512xi32>
    %c255_i32 = arith.constant 255 : i32
    %6 = vector.broadcast %c255_i32 : i32 to vector<1x512xi32>
    %7 = arith.andi %5, %6 : vector<1x512xi32>
    %c15_i32 = arith.constant 15 : i32
    %8 = vector.broadcast %c15_i32 : i32 to vector<1x512xi32>
    %9 = arith.andi %7, %8 : vector<1x512xi32>
    %c16_i32 = arith.constant 16 : i32
    %10 = vector.broadcast %c16_i32 : i32 to vector<1x512xi32>
    %11 = arith.cmpi sge, %7, %10 : vector<1x512xi32>
    %c240_i32 = arith.constant 240 : i32
    %12 = vector.broadcast %c240_i32 : i32 to vector<1x512xi32>
    %13 = arith.cmpi slt, %7, %12 : vector<1x512xi32>
    %c1_i32 = arith.constant 1 : i32
    %14 = vector.broadcast %c1_i32 : i32 to vector<1x512xi32>
    %15 = arith.cmpi sge, %9, %14 : vector<1x512xi32>
    %c15_i32_4 = arith.constant 15 : i32
    %16 = vector.broadcast %c15_i32_4 : i32 to vector<1x512xi32>
    %17 = arith.cmpi slt, %9, %16 : vector<1x512xi32>
    %18 = arith.andi %11, %15 : vector<1x512xi1>
    %19 = arith.andi %11, %17 : vector<1x512xi1>
    %20 = arith.andi %13, %15 : vector<1x512xi1>
    %21 = arith.andi %13, %17 : vector<1x512xi1>
    %c17_i32 = arith.constant 17 : i32
    %22 = tpu.dynamic_rotate %4 by %c17_i32 dim 1 : vector<32x512xf32>, i32 -> vector<32x512xf32>
    %cst = arith.constant 0.000000e+00 : f32
    %23 = vector.shape_cast %18 : vector<1x512xi1> to vector<1x512xi1>
    %24 = vector.broadcast %23 : vector<1x512xi1> to vector<32x512xi1>
    %25 = vector.broadcast %cst : f32 to vector<32x512xf32>
    %26 = arith.select %24, %22, %25 : vector<32x512xi1>, vector<32x512xf32>
    %c16_i32_5 = arith.constant 16 : i32
    %27 = tpu.dynamic_rotate %4 by %c16_i32_5 dim 1 : vector<32x512xf32>, i32 -> vector<32x512xf32>
    %cst_6 = arith.constant 0.000000e+00 : f32
    %28 = vector.shape_cast %11 : vector<1x512xi1> to vector<1x512xi1>
    %29 = vector.broadcast %28 : vector<1x512xi1> to vector<32x512xi1>
    %30 = vector.broadcast %cst_6 : f32 to vector<32x512xf32>
    %31 = arith.select %29, %27, %30 : vector<32x512xi1>, vector<32x512xf32>
    %c15_i32_7 = arith.constant 15 : i32
    %32 = tpu.dynamic_rotate %4 by %c15_i32_7 dim 1 : vector<32x512xf32>, i32 -> vector<32x512xf32>
    %cst_8 = arith.constant 0.000000e+00 : f32
    %33 = vector.shape_cast %19 : vector<1x512xi1> to vector<1x512xi1>
    %34 = vector.broadcast %33 : vector<1x512xi1> to vector<32x512xi1>
    %35 = vector.broadcast %cst_8 : f32 to vector<32x512xf32>
    %36 = arith.select %34, %32, %35 : vector<32x512xi1>, vector<32x512xf32>
    %c1_i32_9 = arith.constant 1 : i32
    %37 = tpu.dynamic_rotate %4 by %c1_i32_9 dim 1 : vector<32x512xf32>, i32 -> vector<32x512xf32>
    %cst_10 = arith.constant 0.000000e+00 : f32
    %38 = vector.shape_cast %15 : vector<1x512xi1> to vector<1x512xi1>
    %39 = vector.broadcast %38 : vector<1x512xi1> to vector<32x512xi1>
    %40 = vector.broadcast %cst_10 : f32 to vector<32x512xf32>
    %41 = arith.select %39, %37, %40 : vector<32x512xi1>, vector<32x512xf32>
    %c511_i32 = arith.constant 511 : i32
    %42 = tpu.dynamic_rotate %4 by %c511_i32 dim 1 : vector<32x512xf32>, i32 -> vector<32x512xf32>
    %cst_11 = arith.constant 0.000000e+00 : f32
    %43 = vector.shape_cast %17 : vector<1x512xi1> to vector<1x512xi1>
    %44 = vector.broadcast %43 : vector<1x512xi1> to vector<32x512xi1>
    %45 = vector.broadcast %cst_11 : f32 to vector<32x512xf32>
    %46 = arith.select %44, %42, %45 : vector<32x512xi1>, vector<32x512xf32>
    %c497_i32 = arith.constant 497 : i32
    %47 = tpu.dynamic_rotate %4 by %c497_i32 dim 1 : vector<32x512xf32>, i32 -> vector<32x512xf32>
    %cst_12 = arith.constant 0.000000e+00 : f32
    %48 = vector.shape_cast %20 : vector<1x512xi1> to vector<1x512xi1>
    %49 = vector.broadcast %48 : vector<1x512xi1> to vector<32x512xi1>
    %50 = vector.broadcast %cst_12 : f32 to vector<32x512xf32>
    %51 = arith.select %49, %47, %50 : vector<32x512xi1>, vector<32x512xf32>
    %c496_i32 = arith.constant 496 : i32
    %52 = tpu.dynamic_rotate %4 by %c496_i32 dim 1 : vector<32x512xf32>, i32 -> vector<32x512xf32>
    %cst_13 = arith.constant 0.000000e+00 : f32
    %53 = vector.shape_cast %13 : vector<1x512xi1> to vector<1x512xi1>
    %54 = vector.broadcast %53 : vector<1x512xi1> to vector<32x512xi1>
    %55 = vector.broadcast %cst_13 : f32 to vector<32x512xf32>
    %56 = arith.select %54, %52, %55 : vector<32x512xi1>, vector<32x512xf32>
    %c495_i32 = arith.constant 495 : i32
    %57 = tpu.dynamic_rotate %4 by %c495_i32 dim 1 : vector<32x512xf32>, i32 -> vector<32x512xf32>
    %cst_14 = arith.constant 0.000000e+00 : f32
    %58 = vector.shape_cast %21 : vector<1x512xi1> to vector<1x512xi1>
    %59 = vector.broadcast %58 : vector<1x512xi1> to vector<32x512xi1>
    %60 = vector.broadcast %cst_14 : f32 to vector<32x512xf32>
    %61 = arith.select %59, %57, %60 : vector<32x512xi1>, vector<32x512xf32>
    %62 = tpu.concatenate %26, %31, %36, %41, %4, %46, %51, %56, %61 in 0 : vector<32x512xf32>, vector<32x512xf32>, vector<32x512xf32>, vector<32x512xf32>, vector<32x512xf32>, vector<32x512xf32>, vector<32x512xf32>, vector<32x512xf32>, vector<32x512xf32> -> vector<288x512xf32>
    %c0_15 = arith.constant 0 : index
    %c0_16 = arith.constant 0 : index
    %63 = vector.load %arg2[%c0_15, %c0_16] : memref<32x288xf32, #tpu.memory_space<vmem>>, vector<32x288xf32>
    %64 = arith.truncf %63 : vector<32x288xf32> to vector<32x288xbf16>
    %65 = arith.truncf %62 : vector<288x512xf32> to vector<288x512xbf16>
    %cst_17 = arith.constant dense<0.000000e+00> : vector<32x512xf32>
    %66 = tpu.matmul %64, %65, %cst_17 {dimension_numbers = #tpu.dot_dimension_numbers<[1], [0], [0], [1], [0, 0, 1, 1], [], []>} : vector<32x288xbf16>, vector<288x512xbf16>, vector<32x512xf32> -> vector<32x512xf32>
    %c0_18 = arith.constant 0 : index
    %c0_19 = arith.constant 0 : index
    %67 = vector.load %arg3[%c0_18, %c0_19] : memref<32x1xf32, #tpu.memory_space<vmem>>, vector<32x1xf32>
    %68 = vector.broadcast %67 : vector<32x1xf32> to vector<32x512xf32>
    %69 = arith.addf %66, %68 : vector<32x512xf32>
    %70 = vector.extract_strided_slice %69 {offsets = [0, 0], sizes = [32, 256], strides = [1, 1]} : vector<32x512xf32> to vector<32x256xf32>
    %c0_20 = arith.constant 0 : index
    %c0_21 = arith.constant 0 : index
    %c0_22 = arith.constant 0 : index
    %71 = vector.load %arg4[%c0_20, %c0_21, %c0_22] : memref<2x32x256xf32, #tpu.memory_space<vmem>>, vector<1x32x256xf32>
    %72 = vector.shape_cast %71 : vector<1x32x256xf32> to vector<32x256xf32>
    %73 = vector.shape_cast %70 : vector<32x256xf32> to vector<1x32x256xf32>
    tpu.vector_store %arg4[%c0_20, %c0_21, %c0_22], %73 {strides = array<i32>} : memref<2x32x256xf32, #tpu.memory_space<vmem>>, vector<1x32x256xf32>,
    %74 = vector.extract_strided_slice %69 {offsets = [0, 256], sizes = [32, 256], strides = [1, 1]} : vector<32x512xf32> to vector<32x256xf32>
    %c1_23 = arith.constant 1 : index
    %c0_24 = arith.constant 0 : index
    %c0_25 = arith.constant 0 : index
    %75 = vector.load %arg4[%c1_23, %c0_24, %c0_25] : memref<2x32x256xf32, #tpu.memory_space<vmem>>, vector<1x32x256xf32>
    %76 = vector.shape_cast %75 : vector<1x32x256xf32> to vector<32x256xf32>
    %77 = vector.shape_cast %74 : vector<32x256xf32> to vector<1x32x256xf32>
    tpu.vector_store %arg4[%c1_23, %c0_24, %c0_25], %77 {strides = array<i32>} : memref<2x32x256xf32, #tpu.memory_space<vmem>>, vector<1x32x256xf32>,
    return
  }
  func.func @transform_0(%arg0: i32) -> (i32, i32, i32) {
    %c0_i32 = arith.constant 0 : i32
    %c0_i32_0 = arith.constant 0 : i32
    %c0_i32_1 = arith.constant 0 : i32
    return %arg0, %c0_i32, %c0_i32_0 : i32, i32, i32
  }
  func.func @transform_1(%arg0: i32) -> (i32, i32) {
    %c0_i32 = arith.constant 0 : i32
    %c0_i32_0 = arith.constant 0 : i32
    %c0_i32_1 = arith.constant 0 : i32
    return %c0_i32, %c0_i32_0 : i32, i32
  }
  func.func @transform_2(%arg0: i32) -> (i32, i32) {
    %c0_i32 = arith.constant 0 : i32
    %c0_i32_0 = arith.constant 0 : i32
    %c0_i32_1 = arith.constant 0 : i32
    return %c0_i32, %c0_i32_0 : i32, i32
  }
  func.func @transform_3(%arg0: i32) -> (i32, i32, i32) {
    %c0_i32 = arith.constant 0 : i32
    %c0_i32_0 = arith.constant 0 : i32
    %c0_i32_1 = arith.constant 0 : i32
    return %arg0, %c0_i32, %c0_i32_0 : i32, i32, i32
  }
}

</mosaic_0001>

<llo_original>
// kernel: convbn_forward.1
$region0: #{convbn_forward.1}
  #allocation0 [shape = 'u32[]', space=smem, size = 0x4, offset = 0x4, fixed_abs, tag = 'smem constant byte address 0x4 - core index']
  #allocation1 [shape = 'u32[144,128]{1,0:T(1,128)}', space=vmem, size = 0x12000, scoped, tag = 'internal scratch']
  %s0 = inlined_call_operand.vmem [shape: f32[2,32,256], index: 0, kind: input, shape index: {}]
  %s1 = inlined_call_operand.vmem [shape: f32[32,288], index: 1, kind: input, shape index: {}]
  %s2 = inlined_call_operand.vmem [shape: f32[32,1], index: 2, kind: input, shape index: {}]
  %s3 = inlined_call_operand.vmem [shape: f32[2,32,256], index: 3, kind: output, shape index: {}]
  %s4 = sld [smem:[#allocation0]]
  $region22: #{convbn_forward.1} parent=0
    _
  %s6 = ssub.s32 1, %s4
  %s7 = scalar_select 0, %s6, %s4
  // Predicated region
  $region2: #{convbn_forward.1} parent=0 // pred_check
    _
  $region3: #{convbn_forward.1} parent=0 // pred_check_branch
    %9 = sbr.rel (0) target = $region5
  $region4: #{convbn_forward.1} parent=0 // pred_region
    _
  $region5: #{convbn_forward.1} parent=0 // pred_fallthru
    _
  // Predicated region
  $region6: #{convbn_forward.1} parent=0 // pred_check
    _
  $region7: #{convbn_forward.1} parent=0 // pred_check_branch
    %11 = sbr.rel (0) target = $region9
  $region8: #{convbn_forward.1} parent=0 // pred_region
    _
  $region9: #{convbn_forward.1} parent=0 // pred_fallthru
    _
  // Predicated region
  $region10: #{convbn_forward.1} parent=0 // pred_check
    _
  $region11: #{convbn_forward.1} parent=0 // pred_check_branch
    %13 = sbr.rel (0) target = $region13
  $region12: #{convbn_forward.1} parent=0 // pred_region
    _
  $region13: #{convbn_forward.1} parent=0 // pred_fallthru
    _
  %v15 = vld [vmem:[%s0] sm:$0xff]
  %v16 = vld [vmem:[%s0 + $0x8] sm:$0xff]
  %v17 = vld [vmem:[%s0 + $0x10] sm:$0xff]
  %v18 = vld [vmem:[%s0 + $0x18] sm:$0xff]
  %v19 = vld [vmem:[%s0 + $0x20] sm:$0xff]
  %v20 = vld [vmem:[%s0 + $0x28] sm:$0xff]
  %v21 = vld [vmem:[%s0 + $0x30] sm:$0xff]
  %v22 = vld [vmem:[%s0 + $0x38] sm:$0xff]
  %s23 = scalar_lea.vmem %s0, 64
  %v24 = vld [vmem:[%s23] sm:$0xff]
  %v25 = vld [vmem:[%s23 + $0x8] sm:$0xff]
  %v26 = vld [vmem:[%s23 + $0x10] sm:$0xff]
  %v27 = vld [vmem:[%s23 + $0x18] sm:$0xff]
  %v28 = vld [vmem:[%s23 + $0x20] sm:$0xff]
  %v29 = vld [vmem:[%s23 + $0x28] sm:$0xff]
  %v30 = vld [vmem:[%s23 + $0x30] sm:$0xff]
  %v31 = vld [vmem:[%s23 + $0x38] sm:$0xff]
  %v32 = vlaneseq
  %v33 = vand.u32 %v32, 127
  %v34 = vadd.s32 %v33, 128
  %v35 = vadd.s32 %v33, 256
  %v36 = vadd.s32 %v33, 384
  %v37 = vand.u32 %v33, 255
  %v38 = vand.u32 %v34, 255
  %v39 = vand.u32 %v35, 255
  %v40 = vand.u32 %v36, 255
  %v41 = vand.u32 %v37, 15
  %v42 = vand.u32 %v38, 15
  %v43 = vand.u32 %v39, 15
  %v44 = vand.u32 %v40, 15
  %vm45 = vcmp.ge.s32.totalorder %v37, 16
  %vm46 = vcmp.ge.s32.totalorder %v38, 16
  %vm47 = vcmp.ge.s32.totalorder %v39, 16
  %vm48 = vcmp.ge.s32.totalorder %v40, 16
  %vm49 = vcmp.lt.s32.totalorder %v37, 240
  %vm50 = vcmp.lt.s32.totalorder %v38, 240
  %vm51 = vcmp.lt.s32.totalorder %v39, 240
  %vm52 = vcmp.lt.s32.totalorder %v40, 240
  %vm53 = vcmp.ge.s32.totalorder %v41, 1
  %vm54 = vcmp.ge.s32.totalorder %v42, 1
  %vm55 = vcmp.ge.s32.totalorder %v43, 1
  %vm56 = vcmp.ge.s32.totalorder %v44, 1
  %vm57 = vcmp.lt.s32.totalorder %v41, 15
  %vm58 = vcmp.lt.s32.totalorder %v42, 15
  %vm59 = vcmp.lt.s32.totalorder %v43, 15
  %vm60 = vcmp.lt.s32.totalorder %v44, 15
  %vm61 = vmand %vm45, %vm53
  %vm62 = vmand %vm46, %vm54
  %vm63 = vmand %vm47, %vm55
  %vm64 = vmand %vm48, %vm56
  %vm65 = vmand %vm45, %vm57
  %vm66 = vmand %vm46, %vm58
  %vm67 = vmand %vm47, %vm59
  %vm68 = vmand %vm48, %vm60
  %vm69 = vmand %vm49, %vm53
  %vm70 = vmand %vm50, %vm54
  %vm71 = vmand %vm51, %vm55
  %vm72 = vmand %vm52, %vm56
  %vm73 = vmand %vm49, %vm57
  %vm74 = vmand %vm50, %vm58
  %vm75 = vmand %vm51, %vm59
  %vm76 = vmand %vm52, %vm60
  %77 = vrot.lane.b32.xlu0 %v15, 17
  %v78 = vpop.permute.xlu0 %77
  %79 = vrot.lane.b32.xlu0 %v17, 17
  %v80 = vpop.permute.xlu0 %79
  %81 = vrot.lane.b32.xlu0 %v19, 17
  %v82 = vpop.permute.xlu0 %81
  %83 = vrot.lane.b32.xlu0 %v21, 17
  %v84 = vpop.permute.xlu0 %83
  %85 = vrot.lane.b32.xlu0 %v16, 17
  %v86 = vpop.permute.xlu0 %85
  %87 = vrot.lane.b32.xlu0 %v18, 17
  %v88 = vpop.permute.xlu0 %87
  %89 = vrot.lane.b32.xlu0 %v20, 17
  %v90 = vpop.permute.xlu0 %89
  %91 = vrot.lane.b32.xlu0 %v22, 17
  %v92 = vpop.permute.xlu0 %91
  %93 = vrot.lane.b32.xlu0 %v24, 17
  %v94 = vpop.permute.xlu0 %93
  %95 = vrot.lane.b32.xlu0 %v26, 17
  %v96 = vpop.permute.xlu0 %95
  %97 = vrot.lane.b32.xlu0 %v28, 17
  %v98 = vpop.permute.xlu0 %97
  %99 = vrot.lane.b32.xlu0 %v30, 17
  %v100 = vpop.permute.xlu0 %99
  %101 = vrot.lane.b32.xlu0 %v25, 17
  %v102 = vpop.permute.xlu0 %101
  %103 = vrot.lane.b32.xlu0 %v27, 17
  %v104 = vpop.permute.xlu0 %103
  %105 = vrot.lane.b32.xlu0 %v29, 17
  %v106 = vpop.permute.xlu0 %105
  %107 = vrot.lane.b32.xlu0 %v31, 17
  %v108 = vpop.permute.xlu0 %107
  %vm109 = vcmp.lt.s32.totalorder %v33, 17
  %v110 = vsel %vm109, %v94, %v102
  %v111 = vsel %vm109, %v96, %v104
  %v112 = vsel %vm109, %v98, %v106
  %v113 = vsel %vm109, %v100, %v108
  %v114 = vsel %vm109, %v86, %v94
  %v115 = vsel %vm109, %v88, %v96
  %v116 = vsel %vm109, %v90, %v98
  %v117 = vsel %vm109, %v92, %v100
  %v118 = vsel %vm109, %v78, %v86
  %v119 = vsel %vm109, %v80, %v88
  %v120 = vsel %vm109, %v82, %v90
  %v121 = vsel %vm109, %v84, %v92
  %v122 = vsel %vm109, %v102, %v78
  %v123 = vsel %vm109, %v104, %v80
  %v124 = vsel %vm109, %v106, %v82
  %v125 = vsel %vm109, %v108, %v84
  %v126 = vsel %vm61, 1, 0
  %v127 = vsel %vm62, 1, 0
  %v128 = vsel %vm63, 1, 0
  %v129 = vsel %vm64, 1, 0
  %vm130 = vcmp.eq.s32.totalorder %v126, 1
  %vm131 = vcmp.eq.s32.totalorder %v127, 1
  %vm132 = vcmp.eq.s32.totalorder %v128, 1
  %vm133 = vcmp.eq.s32.totalorder %v129, 1
  %v134 = vsel %vm130, %v122, 0.0
  %v135 = vsel %vm131, %v118, 0.0
  %v136 = vsel %vm132, %v114, 0.0
  %v137 = vsel %vm133, %v110, 0.0
  %v138 = vsel %vm130, %v123, 0.0
  %v139 = vsel %vm131, %v119, 0.0
  %v140 = vsel %vm132, %v115, 0.0
  %v141 = vsel %vm133, %v111, 0.0
  %v142 = vsel %vm130, %v124, 0.0
  %v143 = vsel %vm131, %v120, 0.0
  %v144 = vsel %vm132, %v116, 0.0
  %v145 = vsel %vm133, %v112, 0.0
  %v146 = vsel %vm130, %v125, 0.0
  %v147 = vsel %vm131, %v121, 0.0
  %v148 = vsel %vm132, %v117, 0.0
  %v149 = vsel %vm133, %v113, 0.0
  %150 = vrot.lane.b32.xlu0 %v15, 16
  %v151 = vpop.permute.xlu0 %150
  %152 = vrot.lane.b32.xlu0 %v17, 16
  %v153 = vpop.permute.xlu0 %152
  %154 = vrot.lane.b32.xlu0 %v19, 16
  %v155 = vpop.permute.xlu0 %154
  %156 = vrot.lane.b32.xlu0 %v21, 16
  %v157 = vpop.permute.xlu0 %156
  %158 = vrot.lane.b32.xlu0 %v16, 16
  %v159 = vpop.permute.xlu0 %158
  %160 = vrot.lane.b32.xlu0 %v18, 16
  %v161 = vpop.permute.xlu0 %160
  %162 = vrot.lane.b32.xlu0 %v20, 16
  %v163 = vpop.permute.xlu0 %162
  %164 = vrot.lane.b32.xlu0 %v22, 16
  %v165 = vpop.permute.xlu0 %164
  %166 = vrot.lane.b32.xlu0 %v24, 16
  %v167 = vpop.permute.xlu0 %166
  %168 = vrot.lane.b32.xlu0 %v26, 16
  %v169 = vpop.permute.xlu0 %168
  %170 = vrot.lane.b32.xlu0 %v28, 16
  %v171 = vpop.permute.xlu0 %170
  %172 = vrot.lane.b32.xlu0 %v30, 16
  %v173 = vpop.permute.xlu0 %172
  %174 = vrot.lane.b32.xlu0 %v25, 16
  %v175 = vpop.permute.xlu0 %174
  %176 = vrot.lane.b32.xlu0 %v27, 16
  %v177 = vpop.permute.xlu0 %176
  %178 = vrot.lane.b32.xlu0 %v29, 16
  %v179 = vpop.permute.xlu0 %178
  %180 = vrot.lane.b32.xlu0 %v31, 16
  %v181 = vpop.permute.xlu0 %180
  %vm182 = vcmp.lt.s32.totalorder %v33, 16
  %v183 = vsel %vm182, %v167, %v175
  %v184 = vsel %vm182, %v169, %v177
  %v185 = vsel %vm182, %v171, %v179
  %v186 = vsel %vm182, %v173, %v181
  %v187 = vsel %vm182, %v159, %v167
  %v188 = vsel %vm182, %v161, %v169
  %v189 = vsel %vm182, %v163, %v171
  %v190 = vsel %vm182, %v165, %v173
  %v191 = vsel %vm182, %v151, %v159
  %v192 = vsel %vm182, %v153, %v161
  %v193 = vsel %vm182, %v155, %v163
  %v194 = vsel %vm182, %v157, %v165
  %v195 = vsel %vm182, %v175, %v151
  %v196 = vsel %vm182, %v177, %v153
  %v197 = vsel %vm182, %v179, %v155
  %v198 = vsel %vm182, %v181, %v157
  %v199 = vsel %vm45, 1, 0
  %v200 = vsel %vm46, 1, 0
  %v201 = vsel %vm47, 1, 0
  %v202 = vsel %vm48, 1, 0
  %vm203 = vcmp.eq.s32.totalorder %v199, 1
  %vm204 = vcmp.eq.s32.totalorder %v200, 1
  %vm205 = vcmp.eq.s32.totalorder %v201, 1
  %vm206 = vcmp.eq.s32.totalorder %v202, 1
  %v207 = vsel %vm203, %v195, 0.0
  %v208 = vsel %vm204, %v191, 0.0
  %v209 = vsel %vm205, %v187, 0.0
  %v210 = vsel %vm206, %v183, 0.0
  %v211 = vsel %vm203, %v196, 0.0
  %v212 = vsel %vm204, %v192, 0.0
  %v213 = vsel %vm205, %v188, 0.0
  %v214 = vsel %vm206, %v184, 0.0
  %v215 = vsel %vm203, %v197, 0.0
  %v216 = vsel %vm204, %v193, 0.0
  %v217 = vsel %vm205, %v189, 0.0
  %v218 = vsel %vm206, %v185, 0.0
  %v219 = vsel %vm203, %v198, 0.0
  %v220 = vsel %vm204, %v194, 0.0
  %v221 = vsel %vm205, %v190, 0.0
  %v222 = vsel %vm206, %v186, 0.0
  %223 = vrot.lane.b32.xlu0 %v15, 15
  %v224 = vpop.permute.xlu0 %223
  %225 = vrot.lane.b32.xlu0 %v17, 15
  %v226 = vpop.permute.xlu0 %225
  %227 = vrot.lane.b32.xlu0 %v19, 15
  %v228 = vpop.permute.xlu0 %227
  %229 = vrot.lane.b32.xlu0 %v21, 15
  %v230 = vpop.permute.xlu0 %229
  %231 = vrot.lane.b32.xlu0 %v16, 15
  %v232 = vpop.permute.xlu0 %231
  %233 = vrot.lane.b32.xlu0 %v18, 15
  %v234 = vpop.permute.xlu0 %233
  %235 = vrot.lane.b32.xlu0 %v20, 15
  %v236 = vpop.permute.xlu0 %235
  %237 = vrot.lane.b32.xlu0 %v22, 15
  %v238 = vpop.permute.xlu0 %237
  %239 = vrot.lane.b32.xlu0 %v24, 15
  %v240 = vpop.permute.xlu0 %239
  %241 = vrot.lane.b32.xlu0 %v26, 15
  %v242 = vpop.permute.xlu0 %241
  %243 = vrot.lane.b32.xlu0 %v28, 15
  %v244 = vpop.permute.xlu0 %243
  %245 = vrot.lane.b32.xlu0 %v30, 15
  %v246 = vpop.permute.xlu0 %245
  %247 = vrot.lane.b32.xlu0 %v25, 15
  %v248 = vpop.permute.xlu0 %247
  %249 = vrot.lane.b32.xlu0 %v27, 15
  %v250 = vpop.permute.xlu0 %249
  %251 = vrot.lane.b32.xlu0 %v29, 15
  %v252 = vpop.permute.xlu0 %251
  %253 = vrot.lane.b32.xlu0 %v31, 15
  %v254 = vpop.permute.xlu0 %253
  %vm255 = vcmp.lt.s32.totalorder %v33, 15
  %v256 = vsel %vm255, %v240, %v248
  %v257 = vsel %vm255, %v242, %v250
  %v258 = vsel %vm255, %v244, %v252
  %v259 = vsel %vm255, %v246, %v254
  %v260 = vsel %vm255, %v232, %v240
  %v261 = vsel %vm255, %v234, %v242
  %v262 = vsel %vm255, %v236, %v244
  %v263 = vsel %vm255, %v238, %v246
  %v264 = vsel %vm255, %v224, %v232
  %v265 = vsel %vm255, %v226, %v234
  %v266 = vsel %vm255, %v228, %v236
  %v267 = vsel %vm255, %v230, %v238
  %v268 = vsel %vm255, %v248, %v224
  %v269 = vsel %vm255, %v250, %v226
  %v270 = vsel %vm255, %v252, %v228
  %v271 = vsel %vm255, %v254, %v230
  %v272 = vsel %vm65, 1, 0
  %v273 = vsel %vm66, 1, 0
  %v274 = vsel %vm67, 1, 0
  %v275 = vsel %vm68, 1, 0
  %vm276 = vcmp.eq.s32.totalorder %v272, 1
  %vm277 = vcmp.eq.s32.totalorder %v273, 1
  %vm278 = vcmp.eq.s32.totalorder %v274, 1
  %vm279 = vcmp.eq.s32.totalorder %v275, 1
  %v280 = vsel %vm276, %v268, 0.0
  %v281 = vsel %vm277, %v264, 0.0
  %v282 = vsel %vm278, %v260, 0.0
  %v283 = vsel %vm279, %v256, 0.0
  %v284 = vsel %vm276, %v269, 0.0
  %v285 = vsel %vm277, %v265, 0.0
  %v286 = vsel %vm278, %v261, 0.0
  %v287 = vsel %vm279, %v257, 0.0
  %v288 = vsel %vm276, %v270, 0.0
  %v289 = vsel %vm277, %v266, 0.0
  %v290 = vsel %vm278, %v262, 0.0
  %v291 = vsel %vm279, %v258, 0.0
  %v292 = vsel %vm276, %v271, 0.0
  %v293 = vsel %vm277, %v267, 0.0
  %v294 = vsel %vm278, %v263, 0.0
  %v295 = vsel %vm279, %v259, 0.0
  %296 = vrot.lane.b32.xlu0 %v15, 1
  %v297 = vpop.permute.xlu0 %296
  %298 = vrot.lane.b32.xlu0 %v17, 1
  %v299 = vpop.permute.xlu0 %298
  %300 = vrot.lane.b32.xlu0 %v19, 1
  %v301 = vpop.permute.xlu0 %300
  %302 = vrot.lane.b32.xlu0 %v21, 1
  %v303 = vpop.permute.xlu0 %302
  %304 = vrot.lane.b32.xlu0 %v16, 1
  %v305 = vpop.permute.xlu0 %304
  %306 = vrot.lane.b32.xlu0 %v18, 1
  %v307 = vpop.permute.xlu0 %306
  %308 = vrot.lane.b32.xlu0 %v20, 1
  %v309 = vpop.permute.xlu0 %308
  %310 = vrot.lane.b32.xlu0 %v22, 1
  %v311 = vpop.permute.xlu0 %310
  %312 = vrot.lane.b32.xlu0 %v24, 1
  %v313 = vpop.permute.xlu0 %312
  %314 = vrot.lane.b32.xlu0 %v26, 1
  %v315 = vpop.permute.xlu0 %314
  %316 = vrot.lane.b32.xlu0 %v28, 1
  %v317 = vpop.permute.xlu0 %316
  %318 = vrot.lane.b32.xlu0 %v30, 1
  %v319 = vpop.permute.xlu0 %318
  %320 = vrot.lane.b32.xlu0 %v25, 1
  %v321 = vpop.permute.xlu0 %320
  %322 = vrot.lane.b32.xlu0 %v27, 1
  %v323 = vpop.permute.xlu0 %322
  %324 = vrot.lane.b32.xlu0 %v29, 1
  %v325 = vpop.permute.xlu0 %324
  %326 = vrot.lane.b32.xlu0 %v31, 1
  %v327 = vpop.permute.xlu0 %326
  %vm328 = vcmp.lt.s32.totalorder %v33, 1
  %v329 = vsel %vm328, %v313, %v321
  %v330 = vsel %vm328, %v315, %v323
  %v331 = vsel %vm328, %v317, %v325
  %v332 = vsel %vm328, %v319, %v327
  %v333 = vsel %vm328, %v305, %v313
  %v334 = vsel %vm328, %v307, %v315
  %v335 = vsel %vm328, %v309, %v317
  %v336 = vsel %vm328, %v311, %v319
  %v337 = vsel %vm328, %v297, %v305
  %v338 = vsel %vm328, %v299, %v307
  %v339 = vsel %vm328, %v301, %v309
  %v340 = vsel %vm328, %v303, %v311
  %v341 = vsel %vm328, %v321, %v297
  %v342 = vsel %vm328, %v323, %v299
  %v343 = vsel %vm328, %v325, %v301
  %v344 = vsel %vm328, %v327, %v303
  %v345 = vsel %vm53, 1, 0
  %v346 = vsel %vm54, 1, 0
  %v347 = vsel %vm55, 1, 0
  %v348 = vsel %vm56, 1, 0
  %vm349 = vcmp.eq.s32.totalorder %v345, 1
  %vm350 = vcmp.eq.s32.totalorder %v346, 1
  %vm351 = vcmp.eq.s32.totalorder %v347, 1
  %vm352 = vcmp.eq.s32.totalorder %v348, 1
  %v353 = vsel %vm349, %v341, 0.0
  %v354 = vsel %vm350, %v337, 0.0
  %v355 = vsel %vm351, %v333, 0.0
  %v356 = vsel %vm352, %v329, 0.0
  %v357 = vsel %vm349, %v342, 0.0
  %v358 = vsel %vm350, %v338, 0.0
  %v359 = vsel %vm351, %v334, 0.0
  %v360 = vsel %vm352, %v330, 0.0
  %v361 = vsel %vm349, %v343, 0.0
  %v362 = vsel %vm350, %v339, 0.0
  %v363 = vsel %vm351, %v335, 0.0
  %v364 = vsel %vm352, %v331, 0.0
  %v365 = vsel %vm349, %v344, 0.0
  %v366 = vsel %vm350, %v340, 0.0
  %v367 = vsel %vm351, %v336, 0.0
  %v368 = vsel %vm352, %v332, 0.0
  %369 = vrot.lane.b32.xlu0 %v15, 127
  %v370 = vpop.permute.xlu0 %369
  %371 = vrot.lane.b32.xlu0 %v17, 127
  %v372 = vpop.permute.xlu0 %371
  %373 = vrot.lane.b32.xlu0 %v19, 127
  %v374 = vpop.permute.xlu0 %373
  %375 = vrot.lane.b32.xlu0 %v21, 127
  %v376 = vpop.permute.xlu0 %375
  %377 = vrot.lane.b32.xlu0 %v16, 127
  %v378 = vpop.permute.xlu0 %377
  %379 = vrot.lane.b32.xlu0 %v18, 127
  %v380 = vpop.permute.xlu0 %379
  %381 = vrot.lane.b32.xlu0 %v20, 127
  %v382 = vpop.permute.xlu0 %381
  %383 = vrot.lane.b32.xlu0 %v22, 127
  %v384 = vpop.permute.xlu0 %383
  %385 = vrot.lane.b32.xlu0 %v24, 127
  %v386 = vpop.permute.xlu0 %385
  %387 = vrot.lane.b32.xlu0 %v26, 127
  %v388 = vpop.permute.xlu0 %387
  %389 = vrot.lane.b32.xlu0 %v28, 127
  %v390 = vpop.permute.xlu0 %389
  %391 = vrot.lane.b32.xlu0 %v30, 127
  %v392 = vpop.permute.xlu0 %391
  %393 = vrot.lane.b32.xlu0 %v25, 127
  %v394 = vpop.permute.xlu0 %393
  %395 = vrot.lane.b32.xlu0 %v27, 127
  %v396 = vpop.permute.xlu0 %395
  %397 = vrot.lane.b32.xlu0 %v29, 127
  %v398 = vpop.permute.xlu0 %397
  %399 = vrot.lane.b32.xlu0 %v31, 127
  %v400 = vpop.permute.xlu0 %399
  %vm401 = vcmp.lt.s32.totalorder %v33, 127
  %v402 = vsel %vm401, %v386, %v394
  %v403 = vsel %vm401, %v388, %v396
  %v404 = vsel %vm401, %v390, %v398
  %v405 = vsel %vm401, %v392, %v400
  %v406 = vsel %vm401, %v378, %v386
  %v407 = vsel %vm401, %v380, %v388
  %v408 = vsel %vm401, %v382, %v390
  %v409 = vsel %vm401, %v384, %v392
  %v410 = vsel %vm401, %v370, %v378
  %v411 = vsel %vm401, %v372, %v380
  %v412 = vsel %vm401, %v374, %v382
  %v413 = vsel %vm401, %v376, %v384
  %v414 = vsel %vm401, %v394, %v370
  %v415 = vsel %vm401, %v396, %v372
  %v416 = vsel %vm401, %v398, %v374
  %v417 = vsel %vm401, %v400, %v376
  %v418 = vsel %vm57, 1, 0
  %v419 = vsel %vm58, 1, 0
  %v420 = vsel %vm59, 1, 0
  %v421 = vsel %vm60, 1, 0
  %vm422 = vcmp.eq.s32.totalorder %v418, 1
  %vm423 = vcmp.eq.s32.totalorder %v419, 1
  %vm424 = vcmp.eq.s32.totalorder %v420, 1
  %vm425 = vcmp.eq.s32.totalorder %v421, 1
  %v426 = vsel %vm422, %v410, 0.0
  %v427 = vsel %vm423, %v406, 0.0
  %v428 = vsel %vm424, %v402, 0.0
  %v429 = vsel %vm425, %v414, 0.0
  %v430 = vsel %vm422, %v411, 0.0
  %v431 = vsel %vm423, %v407, 0.0
  %v432 = vsel %vm424, %v403, 0.0
  %v433 = vsel %vm425, %v415, 0.0
  %v434 = vsel %vm422, %v412, 0.0
  %v435 = vsel %vm423, %v408, 0.0
  %v436 = vsel %vm424, %v404, 0.0
  %v437 = vsel %vm425, %v416, 0.0
  %v438 = vsel %vm422, %v413, 0.0
  %v439 = vsel %vm423, %v409, 0.0
  %v440 = vsel %vm424, %v405, 0.0
  %v441 = vsel %vm425, %v417, 0.0
  %442 = vrot.lane.b32.xlu0 %v15, 113
  %v443 = vpop.permute.xlu0 %442
  %444 = vrot.lane.b32.xlu0 %v17, 113
  %v445 = vpop.permute.xlu0 %444
  %446 = vrot.lane.b32.xlu0 %v19, 113
  %v447 = vpop.permute.xlu0 %446
  %448 = vrot.lane.b32.xlu0 %v21, 113
  %v449 = vpop.permute.xlu0 %448
  %450 = vrot.lane.b32.xlu0 %v16, 113
  %v451 = vpop.permute.xlu0 %450
  %452 = vrot.lane.b32.xlu0 %v18, 113
  %v453 = vpop.permute.xlu0 %452
  %454 = vrot.lane.b32.xlu0 %v20, 113
  %v455 = vpop.permute.xlu0 %454
  %456 = vrot.lane.b32.xlu0 %v22, 113
  %v457 = vpop.permute.xlu0 %456
  %458 = vrot.lane.b32.xlu0 %v24, 113
  %v459 = vpop.permute.xlu0 %458
  %460 = vrot.lane.b32.xlu0 %v26, 113
  %v461 = vpop.permute.xlu0 %460
  %462 = vrot.lane.b32.xlu0 %v28, 113
  %v463 = vpop.permute.xlu0 %462
  %464 = vrot.lane.b32.xlu0 %v30, 113
  %v465 = vpop.permute.xlu0 %464
  %466 = vrot.lane.b32.xlu0 %v25, 113
  %v467 = vpop.permute.xlu0 %466
  %468 = vrot.lane.b32.xlu0 %v27, 113
  %v469 = vpop.permute.xlu0 %468
  %470 = vrot.lane.b32.xlu0 %v29, 113
  %v471 = vpop.permute.xlu0 %470
  %472 = vrot.lane.b32.xlu0 %v31, 113
  %v473 = vpop.permute.xlu0 %472
  %vm474 = vcmp.lt.s32.totalorder %v33, 113
  %v475 = vsel %vm474, %v459, %v467
  %v476 = vsel %vm474, %v461, %v469
  %v477 = vsel %vm474, %v463, %v471
  %v478 = vsel %vm474, %v465, %v473
  %v479 = vsel %vm474, %v451, %v459
  %v480 = vsel %vm474, %v453, %v461
  %v481 = vsel %vm474, %v455, %v463
  %v482 = vsel %vm474, %v457, %v465
  %v483 = vsel %vm474, %v443, %v451
  %v484 = vsel %vm474, %v445, %v453
  %v485 = vsel %vm474, %v447, %v455
  %v486 = vsel %vm474, %v449, %v457
  %v487 = vsel %vm474, %v467, %v443
  %v488 = vsel %vm474, %v469, %v445
  %v489 = vsel %vm474, %v471, %v447
  %v490 = vsel %vm474, %v473, %v449
  %v491 = vsel %vm69, 1, 0
  %v492 = vsel %vm70, 1, 0
  %v493 = vsel %vm71, 1, 0
  %v494 = vsel %vm72, 1, 0
  %vm495 = vcmp.eq.s32.totalorder %v491, 1
  %vm496 = vcmp.eq.s32.totalorder %v492, 1
  %vm497 = vcmp.eq.s32.totalorder %v493, 1
  %vm498 = vcmp.eq.s32.totalorder %v494, 1
  %v499 = vsel %vm495, %v483, 0.0
  %v500 = vsel %vm496, %v479, 0.0
  %v501 = vsel %vm497, %v475, 0.0
  %v502 = vsel %vm498, %v487, 0.0
  %v503 = vsel %vm495, %v484, 0.0
  %v504 = vsel %vm496, %v480, 0.0
  %v505 = vsel %vm497, %v476, 0.0
  %v506 = vsel %vm498, %v488, 0.0
  %v507 = vsel %vm495, %v485, 0.0
  %v508 = vsel %vm496, %v481, 0.0
  %v509 = vsel %vm497, %v477, 0.0
  %v510 = vsel %vm498, %v489, 0.0
  %v511 = vsel %vm495, %v486, 0.0
  %v512 = vsel %vm496, %v482, 0.0
  %v513 = vsel %vm497, %v478, 0.0
  %v514 = vsel %vm498, %v490, 0.0
  %515 = vrot.lane.b32.xlu0 %v15, 112
  %v516 = vpop.permute.xlu0 %515
  %517 = vrot.lane.b32.xlu0 %v17, 112
  %v518 = vpop.permute.xlu0 %517
  %519 = vrot.lane.b32.xlu0 %v19, 112
  %v520 = vpop.permute.xlu0 %519
  %521 = vrot.lane.b32.xlu0 %v21, 112
  %v522 = vpop.permute.xlu0 %521
  %523 = vrot.lane.b32.xlu0 %v16, 112
  %v524 = vpop.permute.xlu0 %523
  %525 = vrot.lane.b32.xlu0 %v18, 112
  %v526 = vpop.permute.xlu0 %525
  %527 = vrot.lane.b32.xlu0 %v20, 112
  %v528 = vpop.permute.xlu0 %527
  %529 = vrot.lane.b32.xlu0 %v22, 112
  %v530 = vpop.permute.xlu0 %529
  %531 = vrot.lane.b32.xlu0 %v24, 112
  %v532 = vpop.permute.xlu0 %531
  %533 = vrot.lane.b32.xlu0 %v26, 112
  %v534 = vpop.permute.xlu0 %533
  %535 = vrot.lane.b32.xlu0 %v28, 112
  %v536 = vpop.permute.xlu0 %535
  %537 = vrot.lane.b32.xlu0 %v30, 112
  %v538 = vpop.permute.xlu0 %537
  %539 = vrot.lane.b32.xlu0 %v25, 112
  %v540 = vpop.permute.xlu0 %539
  %541 = vrot.lane.b32.xlu0 %v27, 112
  %v542 = vpop.permute.xlu0 %541
  %543 = vrot.lane.b32.xlu0 %v29, 112
  %v544 = vpop.permute.xlu0 %543
  %545 = vrot.lane.b32.xlu0 %v31, 112
  %v546 = vpop.permute.xlu0 %545
  %vm547 = vcmp.lt.s32.totalorder %v33, 112
  %v548 = vsel %vm547, %v532, %v540
  %v549 = vsel %vm547, %v534, %v542
  %v550 = vsel %vm547, %v536, %v544
  %v551 = vsel %vm547, %v538, %v546
  %v552 = vsel %vm547, %v524, %v532
  %v553 = vsel %vm547, %v526, %v534
  %v554 = vsel %vm547, %v528, %v536
  %v555 = vsel %vm547, %v530, %v538
  %v556 = vsel %vm547, %v516, %v524
  %v557 = vsel %vm547, %v518, %v526
  %v558 = vsel %vm547, %v520, %v528
  %v559 = vsel %vm547, %v522, %v530
  %v560 = vsel %vm547, %v540, %v516
  %v561 = vsel %vm547, %v542, %v518
  %v562 = vsel %vm547, %v544, %v520
  %v563 = vsel %vm547, %v546, %v522
  %v564 = vsel %vm49, 1, 0
  %v565 = vsel %vm50, 1, 0
  %v566 = vsel %vm51, 1, 0
  %v567 = vsel %vm52, 1, 0
  %vm568 = vcmp.eq.s32.totalorder %v564, 1
  %vm569 = vcmp.eq.s32.totalorder %v565, 1
  %vm570 = vcmp.eq.s32.totalorder %v566, 1
  %vm571 = vcmp.eq.s32.totalorder %v567, 1
  %v572 = vsel %vm568, %v556, 0.0
  %v573 = vsel %vm569, %v552, 0.0
  %v574 = vsel %vm570, %v548, 0.0
  %v575 = vsel %vm571, %v560, 0.0
  %v576 = vsel %vm568, %v557, 0.0
  %v577 = vsel %vm569, %v553, 0.0
  %v578 = vsel %vm570, %v549, 0.0
  %v579 = vsel %vm571, %v561, 0.0
  %v580 = vsel %vm568, %v558, 0.0
  %v581 = vsel %vm569, %v554, 0.0
  %v582 = vsel %vm570, %v550, 0.0
  %v583 = vsel %vm571, %v562, 0.0
  %v584 = vsel %vm568, %v559, 0.0
  %v585 = vsel %vm569, %v555, 0.0
  %v586 = vsel %vm570, %v551, 0.0
  %v587 = vsel %vm571, %v563, 0.0
  %588 = vrot.lane.b32.xlu0 %v15, 111
  %v589 = vpop.permute.xlu0 %588
  %590 = vrot.lane.b32.xlu0 %v17, 111
  %v591 = vpop.permute.xlu0 %590
  %592 = vrot.lane.b32.xlu0 %v19, 111
  %v593 = vpop.permute.xlu0 %592
  %594 = vrot.lane.b32.xlu0 %v21, 111
  %v595 = vpop.permute.xlu0 %594
  %596 = vrot.lane.b32.xlu0 %v16, 111
  %v597 = vpop.permute.xlu0 %596
  %598 = vrot.lane.b32.xlu0 %v18, 111
  %v599 = vpop.permute.xlu0 %598
  %600 = vrot.lane.b32.xlu0 %v20, 111
  %v601 = vpop.permute.xlu0 %600
  %602 = vrot.lane.b32.xlu0 %v22, 111
  %v603 = vpop.permute.xlu0 %602
  %604 = vrot.lane.b32.xlu0 %v24, 111
  %v605 = vpop.permute.xlu0 %604
  %606 = vrot.lane.b32.xlu0 %v26, 111
  %v607 = vpop.permute.xlu0 %606
  %608 = vrot.lane.b32.xlu0 %v28, 111
  %v609 = vpop.permute.xlu0 %608
  %610 = vrot.lane.b32.xlu0 %v30, 111
  %v611 = vpop.permute.xlu0 %610
  %612 = vrot.lane.b32.xlu0 %v25, 111
  %v613 = vpop.permute.xlu0 %612
  %614 = vrot.lane.b32.xlu0 %v27, 111
  %v615 = vpop.permute.xlu0 %614
  %616 = vrot.lane.b32.xlu0 %v29, 111
  %v617 = vpop.permute.xlu0 %616
  %618 = vrot.lane.b32.xlu0 %v31, 111
  %v619 = vpop.permute.xlu0 %618
  %vm620 = vcmp.lt.s32.totalorder %v33, 111
  %v621 = vsel %vm620, %v605, %v613
  %v622 = vsel %vm620, %v607, %v615
  %v623 = vsel %vm620, %v609, %v617
  %v624 = vsel %vm620, %v611, %v619
  %v625 = vsel %vm620, %v597, %v605
  %v626 = vsel %vm620, %v599, %v607
  %v627 = vsel %vm620, %v601, %v609
  %v628 = vsel %vm620, %v603, %v611
  %v629 = vsel %vm620, %v589, %v597
  %v630 = vsel %vm620, %v591, %v599
  %v631 = vsel %vm620, %v593, %v601
  %v632 = vsel %vm620, %v595, %v603
  %v633 = vsel %vm620, %v613, %v589
  %v634 = vsel %vm620, %v615, %v591
  %v635 = vsel %vm620, %v617, %v593
  %v636 = vsel %vm620, %v619, %v595
  %v637 = vsel %vm73, 1, 0
  %v638 = vsel %vm74, 1, 0
  %v639 = vsel %vm75, 1, 0
  %v640 = vsel %vm76, 1, 0
  %vm641 = vcmp.eq.s32.totalorder %v637, 1
  %vm642 = vcmp.eq.s32.totalorder %v638, 1
  %vm643 = vcmp.eq.s32.totalorder %v639, 1
  %vm644 = vcmp.eq.s32.totalorder %v640, 1
  %v645 = vsel %vm641, %v629, 0.0
  %v646 = vsel %vm642, %v625, 0.0
  %v647 = vsel %vm643, %v621, 0.0
  %v648 = vsel %vm644, %v633, 0.0
  %v649 = vsel %vm641, %v630, 0.0
  %v650 = vsel %vm642, %v626, 0.0
  %v651 = vsel %vm643, %v622, 0.0
  %v652 = vsel %vm644, %v634, 0.0
  %v653 = vsel %vm641, %v631, 0.0
  %v654 = vsel %vm642, %v627, 0.0
  %v655 = vsel %vm643, %v623, 0.0
  %v656 = vsel %vm644, %v635, 0.0
  %v657 = vsel %vm641, %v632, 0.0
  %v658 = vsel %vm642, %v628, 0.0
  %v659 = vsel %vm643, %v624, 0.0
  %v660 = vsel %vm644, %v636, 0.0
  %v661 = vld [vmem:[%s1] sm:$0xff]
  %v662 = vld [vmem:[%s1 + $0x8] sm:$0xff]
  %v663 = vld [vmem:[%s1 + $0x10] sm:$0xff]
  %v664 = vld [vmem:[%s1 + $0x18] sm:$0xff]
  %v665 = vld [vmem:[%s1 + $0x20] sm:$0xff]
  %v666 = vld [vmem:[%s1 + $0x28] sm:$0xff]
  %v667 = vld [vmem:[%s1 + $0x30] sm:$0xff]
  %v668 = vld [vmem:[%s1 + $0x38] sm:$0xff]
  %v669 = vld [vmem:[%s1 + $0x40] sm:$0xff]
  %v670 = vld [vmem:[%s1 + $0x48] sm:$0xff]
  %v671 = vld [vmem:[%s1 + $0x50] sm:$0xff]
  %v672 = vld [vmem:[%s1 + $0x58] sm:$0xff]
  %v673 = vpack.c.bf16 %v664, %v661
  %v674 = vpack.c.bf16 %v665, %v662
  %v675 = vpack.c.bf16 %v666, %v663
  %v676 = vpack.c.bf16 %v670, %v667
  %v677 = vpack.c.bf16 %v671, %v668
  %v678 = vpack.c.bf16 %v672, %v669
  %v679 = vpack.c.bf16 %v138, %v134
  %v680 = vpack.c.bf16 %v139, %v135
  %v681 = vpack.c.bf16 %v140, %v136
  %v682 = vpack.c.bf16 %v141, %v137
  %v683 = vpack.c.bf16 %v146, %v142
  %v684 = vpack.c.bf16 %v147, %v143
  %v685 = vpack.c.bf16 %v148, %v144
  %v686 = vpack.c.bf16 %v149, %v145
  %v687 = vpack.c.bf16 %v211, %v207
  %v688 = vpack.c.bf16 %v212, %v208
  %v689 = vpack.c.bf16 %v213, %v209
  %v690 = vpack.c.bf16 %v214, %v210
  %v691 = vpack.c.bf16 %v219, %v215
  %v692 = vpack.c.bf16 %v220, %v216
  %v693 = vpack.c.bf16 %v221, %v217
  %v694 = vpack.c.bf16 %v222, %v218
  %v695 = vpack.c.bf16 %v284, %v280
  %v696 = vpack.c.bf16 %v285, %v281
  %v697 = vpack.c.bf16 %v286, %v282
  %v698 = vpack.c.bf16 %v287, %v283
  %v699 = vpack.c.bf16 %v292, %v288
  %v700 = vpack.c.bf16 %v293, %v289
  %v701 = vpack.c.bf16 %v294, %v290
  %v702 = vpack.c.bf16 %v295, %v291
  %v703 = vpack.c.bf16 %v357, %v353
  %v704 = vpack.c.bf16 %v358, %v354
  %v705 = vpack.c.bf16 %v359, %v355
  %v706 = vpack.c.bf16 %v360, %v356
  %v707 = vpack.c.bf16 %v365, %v361
  %v708 = vpack.c.bf16 %v366, %v362
  %v709 = vpack.c.bf16 %v367, %v363
  %v710 = vpack.c.bf16 %v368, %v364
  %v711 = vpack.c.bf16 %v17, %v15
  %v712 = vpack.c.bf16 %v18, %v16
  %v713 = vpack.c.bf16 %v26, %v24
  %v714 = vpack.c.bf16 %v27, %v25
  %v715 = vpack.c.bf16 %v21, %v19
  %v716 = vpack.c.bf16 %v22, %v20
  %v717 = vpack.c.bf16 %v30, %v28
  %v718 = vpack.c.bf16 %v31, %v29
  %v719 = vpack.c.bf16 %v430, %v426
  %v720 = vpack.c.bf16 %v431, %v427
  %v721 = vpack.c.bf16 %v432, %v428
  %v722 = vpack.c.bf16 %v433, %v429
  %v723 = vpack.c.bf16 %v438, %v434
  %v724 = vpack.c.bf16 %v439, %v435
  %v725 = vpack.c.bf16 %v440, %v436
  %v726 = vpack.c.bf16 %v441, %v437
  %v727 = vpack.c.bf16 %v503, %v499
  %v728 = vpack.c.bf16 %v504, %v500
  %v729 = vpack.c.bf16 %v505, %v501
  %v730 = vpack.c.bf16 %v506, %v502
  %v731 = vpack.c.bf16 %v511, %v507
  %v732 = vpack.c.bf16 %v512, %v508
  %v733 = vpack.c.bf16 %v513, %v509
  %v734 = vpack.c.bf16 %v514, %v510
  %v735 = vpack.c.bf16 %v576, %v572
  %v736 = vpack.c.bf16 %v577, %v573
  %v737 = vpack.c.bf16 %v578, %v574
  %v738 = vpack.c.bf16 %v579, %v575
  %v739 = vpack.c.bf16 %v584, %v580
  %v740 = vpack.c.bf16 %v585, %v581
  %v741 = vpack.c.bf16 %v586, %v582
  %v742 = vpack.c.bf16 %v587, %v583
  %v743 = vpack.c.bf16 %v649, %v645
  %v744 = vpack.c.bf16 %v650, %v646
  %v745 = vpack.c.bf16 %v651, %v647
  %v746 = vpack.c.bf16 %v652, %v648
  %v747 = vpack.c.bf16 %v657, %v653
  %v748 = vpack.c.bf16 %v658, %v654
  %v749 = vpack.c.bf16 %v659, %v655
  %v750 = vpack.c.bf16 %v660, %v656
  %v751 = vld [vmem:[%s2] sm:$0xff]
  %v752 = vld [vmem:[%s2 + $0x8] sm:$0xff]
  %v753 = vld [vmem:[%s2 + $0x10] sm:$0xff]
  %v754 = vld [vmem:[%s2 + $0x18] sm:$0xff]
  %756 = vset.pattern.permute.xlu0 0
  %757 = vperm.xlu0 %756, %v751
  %v758 = vpop.permute.xlu0 %757
  %761 = vset.pattern.permute.xlu0 0
  %762 = vperm.xlu0 %761, %v752
  %v763 = vpop.permute.xlu0 %762
  %766 = vset.pattern.permute.xlu0 0
  %767 = vperm.xlu0 %766, %v753
  %v768 = vpop.permute.xlu0 %767
  %771 = vset.pattern.permute.xlu0 0
  %772 = vperm.xlu0 %771, %v754
  %v773 = vpop.permute.xlu0 %772
  %vm775 = vcmask 261120
  %v777 = vsel %vm775, %v675, 0
  %v780 = vsel %vm775, %v678, 0
  %782 = vmatprep.subr.bf16.mxu0 %v680
  %783 = vmatpush1.bf16.msra.mxu0 %v679
  %784 = vmatprep.subr.bf16.mxu0 %v684
  %785 = vmatpush1.bf16.msra.mxu0 %v683
  %786 = vmatprep.subr.bf16.mxu0 %v688
  %787 = vmatpush1.bf16.msra.mxu0 %v687
  %788 = vmatprep.subr.bf16.mxu0 %v692
  %789 = vmatpush1.bf16.msra.mxu0 %v691
  %790 = vmatprep.subr.bf16.mxu0 %v696
  %791 = vmatpush1.bf16.msra.mxu0 %v695
  %792 = vmatprep.subr.bf16.mxu0 %v700
  %793 = vmatpush1.bf16.msra.mxu0 %v699
  %794 = vmatprep.subr.bf16.mxu0 %v704
  %795 = vmatpush1.bf16.msra.mxu0 %v703
  %796 = vmatprep.subr.bf16.mxu0 %v708
  %797 = vmatpush1.bf16.msra.mxu0 %v707
  %798 = vmatprep.subr.bf16.mxu0 %v712
  %799 = vmatpush1.bf16.msra.mxu0 %v711
  %800 = vmatprep.subr.bf16.mxu0 %v716
  %801 = vmatpush1.bf16.msra.mxu0 %v715
  %802 = vmatprep.subr.bf16.mxu0 %v720
  %803 = vmatpush1.bf16.msra.mxu0 %v719
  %804 = vmatprep.subr.bf16.mxu0 %v724
  %805 = vmatpush1.bf16.msra.mxu0 %v723
  %806 = vmatprep.subr.bf16.mxu0 %v728
  %807 = vmatpush1.bf16.msra.mxu0 %v727
  %808 = vmatprep.subr.bf16.mxu0 %v732
  %809 = vmatpush1.bf16.msra.mxu0 %v731
  %810 = vmatprep.subr.bf16.mxu0 %v736
  %811 = vmatpush1.bf16.msra.mxu0 %v735
  %812 = vmatprep.subr.bf16.mxu0 %v740
  %813 = vmatpush1.bf16.msra.mxu0 %v739
  %814 = vmatprep.mubr.bf16.mxu0 %v674
  %815 = vmatmul.mubr.bf16.gmra.mrb[0].mxu0 %v673
  %v816 = vpop.f32.mrb[0].mxu0
  %v817 = vadd.f32 %v758, %v816
  %v818 = vpop.f32.mrb[0].mxu0
  %v819 = vadd.f32 %v758, %v818
  %v820 = vpop.f32.mrb[0].mxu0
  %v821 = vadd.f32 %v763, %v820
  %v822 = vpop.f32.mrb[0].mxu0
  %v823 = vadd.f32 %v763, %v822
  %824 = vmatprep.mubr.bf16.mxu0 %v677
  %825 = vmatmul.mubr.bf16.gmra.mrb[0].mxu0 %v676
  %v826 = vpop.f32.mrb[0].mxu0
  %v827 = vadd.f32 %v768, %v826
  %v828 = vpop.f32.mrb[0].mxu0
  %v829 = vadd.f32 %v768, %v828
  %v830 = vpop.f32.mrb[0].mxu0
  %v831 = vadd.f32 %v773, %v830
  %v832 = vpop.f32.mrb[0].mxu0
  %v833 = vadd.f32 %v773, %v832
  %834 = vdwg.mxu0
  %835 = vmatprep.subr.bf16.mxu0 %v744
  %836 = vmatpush1.bf16.msra.mxu0 %v743
  %837 = vmatprep.subr.bf16.mxu0 %v748
  %838 = vmatpush1.bf16.msra.mxu0 %v747
  %839 = vmatprep.subr.bf16.mxu0 0
  %840 = vmatpush1.bf16.msra.mxu0 0
  %841 = vmatprep.subr.bf16.mxu0 0
  %842 = vmatpush1.bf16.msra.mxu0 0
  %843 = vmatprep.subr.bf16.mxu0 0
  %844 = vmatpush1.bf16.msra.mxu0 0
  %845 = vmatprep.subr.bf16.mxu0 0
  %846 = vmatpush1.bf16.msra.mxu0 0
  %847 = vmatprep.subr.bf16.mxu0 0
  %848 = vmatpush1.bf16.msra.mxu0 0
  %849 = vmatprep.subr.bf16.mxu0 0
  %850 = vmatpush1.bf16.msra.mxu0 0
  %851 = vmatprep.subr.bf16.mxu0 0
  %852 = vmatpush1.bf16.msra.mxu0 0
  %853 = vmatprep.subr.bf16.mxu0 0
  %854 = vmatpush1.bf16.msra.mxu0 0
  %855 = vmatprep.subr.bf16.mxu0 0
  %856 = vmatpush1.bf16.msra.mxu0 0
  %857 = vmatprep.subr.bf16.mxu0 0
  %858 = vmatpush1.bf16.msra.mxu0 0
  %859 = vmatprep.subr.bf16.mxu0 0
  %860 = vmatpush1.bf16.msra.mxu0 0
  %861 = vmatprep.subr.bf16.mxu0 0
  %862 = vmatpush1.bf16.msra.mxu0 0
  %863 = vmatprep.subr.bf16.mxu0 0
  %864 = vmatpush1.bf16.msra.mxu0 0
  %865 = vmatprep.subr.bf16.mxu0 0
  %866 = vmatpush1.bf16.msra.mxu0 0
  %867 = vmatprep.mubr.bf16.mxu0 0
  %868 = vmatmul.mubr.bf16.gmra.mrb[0].mxu0 %v777
  %v869 = vpop.f32.mrb[0].mxu0
  %v870 = vadd.f32 %v817, %v869
  %v871 = vpop.f32.mrb[0].mxu0
  %v872 = vadd.f32 %v819, %v871
  %v873 = vpop.f32.mrb[0].mxu0
  %v874 = vadd.f32 %v821, %v873
  %v875 = vpop.f32.mrb[0].mxu0
  %v876 = vadd.f32 %v823, %v875
  %877 = vmatprep.mubr.bf16.mxu0 0
  %878 = vmatmul.mubr.bf16.gmra.mrb[0].mxu0 %v780
  %v879 = vpop.f32.mrb[0].mxu0
  %v880 = vadd.f32 %v827, %v879
  %v881 = vpop.f32.mrb[0].mxu0
  %v882 = vadd.f32 %v829, %v881
  %v883 = vpop.f32.mrb[0].mxu0
  %v884 = vadd.f32 %v831, %v883
  %v885 = vpop.f32.mrb[0].mxu0
  %v886 = vadd.f32 %v833, %v885
  %887 = vdwg.mxu0
  %888 = vmatprep.subr.bf16.mxu0 %v682
  %889 = vmatpush1.bf16.msra.mxu0 %v681
  %890 = vmatprep.subr.bf16.mxu0 %v686
  %891 = vmatpush1.bf16.msra.mxu0 %v685
  %892 = vmatprep.subr.bf16.mxu0 %v690
  %893 = vmatpush1.bf16.msra.mxu0 %v689
  %894 = vmatprep.subr.bf16.mxu0 %v694
  %895 = vmatpush1.bf16.msra.mxu0 %v693
  %896 = vmatprep.subr.bf16.mxu0 %v698
  %897 = vmatpush1.bf16.msra.mxu0 %v697
  %898 = vmatprep.subr.bf16.mxu0 %v702
  %899 = vmatpush1.bf16.msra.mxu0 %v701
  %900 = vmatprep.subr.bf16.mxu0 %v706
  %901 = vmatpush1.bf16.msra.mxu0 %v705
  %902 = vmatprep.subr.bf16.mxu0 %v710
  %903 = vmatpush1.bf16.msra.mxu0 %v709
  %904 = vmatprep.subr.bf16.mxu0 %v714
  %905 = vmatpush1.bf16.msra.mxu0 %v713
  %906 = vmatprep.subr.bf16.mxu0 %v718
  %907 = vmatpush1.bf16.msra.mxu0 %v717
  %908 = vmatprep.subr.bf16.mxu0 %v722
  %909 = vmatpush1.bf16.msra.mxu0 %v721
  %910 = vmatprep.subr.bf16.mxu0 %v726
  %911 = vmatpush1.bf16.msra.mxu0 %v725
  %912 = vmatprep.subr.bf16.mxu0 %v730
  %913 = vmatpush1.bf16.msra.mxu0 %v729
  %914 = vmatprep.subr.bf16.mxu0 %v734
  %915 = vmatpush1.bf16.msra.mxu0 %v733
  %916 = vmatprep.subr.bf16.mxu0 %v738
  %917 = vmatpush1.bf16.msra.mxu0 %v737
  %918 = vmatprep.subr.bf16.mxu0 %v742
  %919 = vmatpush1.bf16.msra.mxu0 %v741
  %920 = vmatprep.mubr.bf16.mxu0 %v674
  %921 = vmatmul.mubr.bf16.gmra.mrb[0].mxu0 %v673
  %v922 = vpop.f32.mrb[0].mxu0
  %v923 = vadd.f32 %v758, %v922
  %v924 = vpop.f32.mrb[0].mxu0
  %v925 = vadd.f32 %v758, %v924
  %v926 = vpop.f32.mrb[0].mxu0
  %v927 = vadd.f32 %v763, %v926
  %v928 = vpop.f32.mrb[0].mxu0
  %v929 = vadd.f32 %v763, %v928
  %930 = vmatprep.mubr.bf16.mxu0 %v677
  %931 = vmatmul.mubr.bf16.gmra.mrb[0].mxu0 %v676
  %v932 = vpop.f32.mrb[0].mxu0
  %v933 = vadd.f32 %v768, %v932
  %v934 = vpop.f32.mrb[0].mxu0
  %v935 = vadd.f32 %v768, %v934
  %v936 = vpop.f32.mrb[0].mxu0
  %v937 = vadd.f32 %v773, %v936
  %v938 = vpop.f32.mrb[0].mxu0
  %v939 = vadd.f32 %v773, %v938
  %940 = vdwg.mxu0
  %941 = vmatprep.subr.bf16.mxu0 %v746
  %942 = vmatpush1.bf16.msra.mxu0 %v745
  %943 = vmatprep.subr.bf16.mxu0 %v750
  %944 = vmatpush1.bf16.msra.mxu0 %v749
  %945 = vmatprep.subr.bf16.mxu0 0
  %946 = vmatpush1.bf16.msra.mxu0 0
  %947 = vmatprep.subr.bf16.mxu0 0
  %948 = vmatpush1.bf16.msra.mxu0 0
  %949 = vmatprep.subr.bf16.mxu0 0
  %950 = vmatpush1.bf16.msra.mxu0 0
  %951 = vmatprep.subr.bf16.mxu0 0
  %952 = vmatpush1.bf16.msra.mxu0 0
  %953 = vmatprep.subr.bf16.mxu0 0
  %954 = vmatpush1.bf16.msra.mxu0 0
  %955 = vmatprep.subr.bf16.mxu0 0
  %956 = vmatpush1.bf16.msra.mxu0 0
  %957 = vmatprep.subr.bf16.mxu0 0
  %958 = vmatpush1.bf16.msra.mxu0 0
  %959 = vmatprep.subr.bf16.mxu0 0
  %960 = vmatpush1.bf16.msra.mxu0 0
  %961 = vmatprep.subr.bf16.mxu0 0
  %962 = vmatpush1.bf16.msra.mxu0 0
  %963 = vmatprep.subr.bf16.mxu0 0
  %964 = vmatpush1.bf16.msra.mxu0 0
  %965 = vmatprep.subr.bf16.mxu0 0
  %966 = vmatpush1.bf16.msra.mxu0 0
  %967 = vmatprep.subr.bf16.mxu0 0
  %968 = vmatpush1.bf16.msra.mxu0 0
  %969 = vmatprep.subr.bf16.mxu0 0
  %970 = vmatpush1.bf16.msra.mxu0 0
  %971 = vmatprep.subr.bf16.mxu0 0
  %972 = vmatpush1.bf16.msra.mxu0 0
  %973 = vmatprep.mubr.bf16.mxu0 0
  %974 = vmatmul.mubr.bf16.gmra.mrb[0].mxu0 %v777
  %v975 = vpop.f32.mrb[0].mxu0
  %v976 = vadd.f32 %v923, %v975
  %v977 = vpop.f32.mrb[0].mxu0
  %v978 = vadd.f32 %v925, %v977
  %v979 = vpop.f32.mrb[0].mxu0
  %v980 = vadd.f32 %v927, %v979
  %v981 = vpop.f32.mrb[0].mxu0
  %v982 = vadd.f32 %v929, %v981
  %983 = vmatprep.mubr.bf16.mxu0 0
  %984 = vmatmul.mubr.bf16.gmra.mrb[0].mxu0 %v780
  %v985 = vpop.f32.mrb[0].mxu0
  %v986 = vadd.f32 %v933, %v985
  %v987 = vpop.f32.mrb[0].mxu0
  %v988 = vadd.f32 %v935, %v987
  %v989 = vpop.f32.mrb[0].mxu0
  %v990 = vadd.f32 %v937, %v989
  %v991 = vpop.f32.mrb[0].mxu0
  %v992 = vadd.f32 %v939, %v991
  %993 = vdwg.mxu0
  %994 = vst [vmem:[%s3] sm:$0xff] %v870
  %995 = vst [vmem:[%s3 + $0x8] sm:$0xff] %v872
  %996 = vst [vmem:[%s3 + $0x10] sm:$0xff] %v874
  %997 = vst [vmem:[%s3 + $0x18] sm:$0xff] %v876
  %998 = vst [vmem:[%s3 + $0x20] sm:$0xff] %v880
  %999 = vst [vmem:[%s3 + $0x28] sm:$0xff] %v882
  %1000 = vst [vmem:[%s3 + $0x30] sm:$0xff] %v884
  %1001 = vst [vmem:[%s3 + $0x38] sm:$0xff] %v886
  %s1002 = scalar_lea.vmem %s3, 64
  %1003 = vst [vmem:[%s1002] sm:$0xff] %v976
  %1004 = vst [vmem:[%s1002 + $0x8] sm:$0xff] %v978
  %1005 = vst [vmem:[%s1002 + $0x10] sm:$0xff] %v980
  %1006 = vst [vmem:[%s1002 + $0x18] sm:$0xff] %v982
  %1007 = vst [vmem:[%s1002 + $0x20] sm:$0xff] %v986
  %1008 = vst [vmem:[%s1002 + $0x28] sm:$0xff] %v988
  %1009 = vst [vmem:[%s1002 + $0x30] sm:$0xff] %v990
  %1010 = vst [vmem:[%s1002 + $0x38] sm:$0xff] %v992
  // Predicated region
  $region14: #{convbn_forward.1} parent=0 // pred_check
    _
  $region15: #{convbn_forward.1} parent=0 // pred_check_branch
    %1012 = sbr.rel (0) target = $region17
  $region16: #{convbn_forward.1} parent=0 // pred_region
    _
  $region17: #{convbn_forward.1} parent=0 // pred_fallthru
    _
  // Predicated region
  $region18: #{convbn_forward.1} parent=0 // pred_check
    _
  $region19: #{convbn_forward.1} parent=0 // pred_check_branch
    %1014 = sbr.rel (0) target = $region21
  $region20: #{convbn_forward.1} parent=0 // pred_region
    _
  $region21: #{convbn_forward.1} parent=0 // pred_fallthru
    _

</llo_original>
